<compile_context>
chip_gen: v6e
topology: v6e:2x2x1
jax: 0.10.0
libtpu: 0.0.40
codegen_flags: <defaults>
</compile_context>

<pallas_src>
import functools

import jax
import jax.numpy as jnp
from jax.experimental import pallas as pl
from jax.experimental.pallas import tpu as pltpu


def _agcrn_cell_kernel(xh_ref, sup_ref, wbig_ref, wc_ref, bias_ref, out_ref,
                       xg_ref, hg_ref, *,
                       num_supports, num_nodes, dim_in, hidden_dim):
    """Fused AGCRN cell for one batch element (grid axis = batch, 'parallel').

    Layouts:
      xh_ref   : (1, N, C)     bf16, [x | h_prev] for this batch element
      sup_ref  : (S*N, N)      bf16, stacked Chebyshev supports (VMEM-resident)
      wbig_ref : (S*C, 3H)     bf16, columns [z | r | candidate-x] (h-rows of the
                                candidate block are zero)
      wc_ref   : (S*H, H)      bf16, candidate h-path weight
      bias_ref : (1, 3H)       f32,  [bz | br | bc]
      out_ref  : (1, N, H)     f32
      xg_ref   : (N, S*C)      bf16 scratch (relayout buffer)
      hg_ref   : (N, S*H)      bf16 scratch (relayout buffer)
    """
    S, N, D, H = num_supports, num_nodes, dim_in, hidden_dim
    C = D + H
    f32, bf16 = jnp.float32, jnp.bfloat16

    xh = xh_ref[0]            # (N, C)
    sup = sup_ref[...]        # (S*N, N)

    # (1) All S graph convolutions of the gate input in ONE MXU call (K = N).
    sxh = jnp.dot(sup, xh, preferred_element_type=f32)           # (S*N, C) f32

    # Relayout the per-support row blocks onto the lane axis so the channel
    # contraction below is a single matmul with K = S*C ("fold S into K").
    # Each iteration is a static, sublane-aligned read (N % 8 == 0) plus a static
    # lane-slice store into scratch — cheap masked vreg ops, no matmul issues.
    for s in range(S):
        xg_ref[:, s * C:(s + 1) * C] = sxh[s * N:(s + 1) * N, :].astype(bf16)
    xg = xg_ref[...]                                              # (N, S*C) bf16

    # (2) z, r and the candidate x-path pre-activations fused along lanes.
    pre = jnp.dot(xg, wbig_ref[...], preferred_element_type=f32) + bias_ref[...]
    z = jax.nn.sigmoid(pre[:, :H])          # static lane slices within a vreg
    r = jax.nn.sigmoid(pre[:, H:2 * H])

    h_prev = xh[:, D:].astype(f32)                                # (N, H)

    # (3) Candidate graph conv of (z * h_prev), again one MXU call over supports.
    zh = (z * h_prev).astype(bf16)
    szh = jnp.dot(sup, zh, preferred_element_type=f32)            # (S*N, H) f32
    for s in range(S):
        hg_ref[:, s * H:(s + 1) * H] = szh[s * N:(s + 1) * N, :].astype(bf16)
    hg = hg_ref[...]                                              # (N, S*H) bf16

    # (4) Candidate h-path weight contraction, K = S*H.  The x-path + bias is
    #     already in pre[:, 2H:].
    cand = pre[:, 2 * H:] + jnp.dot(hg, wc_ref[...], preferred_element_type=f32)
    hc = jnp.tanh(cand)

    # Final GRU-style combine (f32 epilogue).
    out_ref[0] = (r * h_prev + (1.0 - r) * hc).astype(out_ref.dtype)


def build_cheb_supports(supports, cheb_k):
    """AGCN's Chebyshev expansion: for each support A -> [I, A, 2A T_{k-1} - T_{k-2}, ...]."""
    n = supports[0].shape[0]
    eye = jnp.eye(n, dtype=jnp.float32)
    mats = []
    for a in supports:
        ks = [eye, a.astype(jnp.float32)]
        for _ in range(2, cheb_k):
            ks.append(2.0 * a @ ks[-1] - ks[-2])
        mats.extend(ks)
    return jnp.stack(mats, axis=0)          # (S, N, N) f32


def prepare_agcrn_params(supports_stacked, wg, bg, wu, bu, dim_in, hidden_dim):
    """One-time preprocessing (hoisted out of the per-timestep call).

    Returns bf16 packed tensors:
      sup_rows : (S*N, N)    stacked supports
      w_big    : (S*C, 3H)   [Wz | Wr | Wc_x-rows-only] fused along columns
      w_c      : (S*H, H)    candidate h-path rows of Wu
      bias     : (1, 3H)     [bz | br | bc]  (f32, added post-dot)
    """
    S, N, _ = supports_stacked.shape
    D, H = dim_in, hidden_dim
    C = D + H
    assert wg.shape == (S * C, 2 * H) and wu.shape == (S * C, H)

    sup_rows = supports_stacked.reshape(S * N, N).astype(jnp.bfloat16)

    wg3 = wg.reshape(S, C, 2 * H)              # support-major, [x | state] rows
    wu3 = wu.reshape(S, C, H)
    wu3_xonly = wu3.at[:, D:, :].set(0.0)      # candidate x-path only in fused block
    w_big = jnp.concatenate([wg3, wu3_xonly], axis=-1).reshape(S * C, 3 * H)
    w_big = w_big.astype(jnp.bfloat16)
    w_c = wu3[:, D:, :].reshape(S * H, H).astype(jnp.bfloat16)
    bias = jnp.concatenate([bg, bu], axis=-1).astype(jnp.float32)   # (1, 3H)
    return sup_rows, w_big, w_c, bias


@jax.jit
def agcrn_cell(x, state, sup_rows, w_big, w_c, bias):
    """x: (B,N,Din)  state: (B,N,H)  + packed params from prepare_agcrn_params."""
    B, N, D = x.shape
    H = state.shape[-1]
    C = D + H
    S = sup_rows.shape[0] // N
    assert N % 8 == 0, "pad the node count to a multiple of 8"

    # Per-step work: only the gate-input concat + bf16 cast (PyTorch's
    # input_and_state); no transposes, no weight re-packing per step.
    xh = jnp.concatenate([x, state], axis=-1).astype(jnp.bfloat16)   # (B, N, C)

    kernel = functools.partial(_agcrn_cell_kernel, num_supports=S,
                               num_nodes=N, dim_in=D, hidden_dim=H)

    return pl.pallas_call(
        kernel,
        out_shape=jax.ShapeDtypeStruct((B, N, H), jnp.float32),
        grid_spec=pltpu.PrefetchScalarGridSpec(
            num_scalar_prefetch=0,
            grid=(B,),                   # batch axis, sharded across TCs on v7x
            in_specs=[
                pl.BlockSpec((1, N, C), lambda b: (b, 0, 0)),     # streamed per step
                pl.BlockSpec((S * N, N), lambda b: (0, 0)),       # resident supports
                pl.BlockSpec((S * C, 3 * H), lambda b: (0, 0)),   # fused gate/cand-x W
                pl.BlockSpec((S * H, H), lambda b: (0, 0)),       # cand h-path W
                pl.BlockSpec((1, 3 * H), lambda b: (0, 0)),       # fused bias
            ],
            out_specs=pl.BlockSpec((1, N, H), lambda b: (b, 0, 0)),
            scratch_shapes=[
                pltpu.VMEM((N, S * C), jnp.bfloat16),    # xg relayout buffer
                pltpu.VMEM((N, S * H), jnp.bfloat16),    # hg relayout buffer
            ],
        ),
        compiler_params=pltpu.CompilerParams(
            dimension_semantics=("parallel",),
            vmem_limit_bytes=32 * 1024 * 1024,
        ),
    )(xh, sup_rows, w_big, w_c, bias)


def xavier_normal(key, shape):
    fan_in, fan_out = shape
    std = (2.0 / (fan_in + fan_out)) ** 0.5
    return std * jax.random.normal(key, shape, dtype=jnp.float32)


def ref_agcrn_cell(x, state, supports_stacked, wg, bg, wu, bu, hidden_dim):
    """Pure-JAX reference mirroring the PyTorch forward (concat formulation)."""
    S = supports_stacked.shape[0]

    def agcn(inp, w, b):
        xg = jnp.concatenate(
            [jnp.einsum('nm,bmc->bnc', supports_stacked[s], inp) for s in range(S)],
            axis=-1)
        return jnp.einsum('bni,io->bno', xg, w) + b[0]

    inp_state = jnp.concatenate([x, state], axis=-1)
    z_r = jax.nn.sigmoid(agcn(inp_state, wg, bg))
    z, r = z_r[..., :hidden_dim], z_r[..., hidden_dim:]
    hc = jnp.tanh(agcn(jnp.concatenate([x, z * state], axis=-1), wu, bu))
    return r * state + (1.0 - r) * hc


if __name__ == "__main__":
    # Small shapes consistent with the PyTorch module.
    batch, node_num, dim_in, hidden, cheb_k = 2, 16, 4, 8, 3
    cat_dim = dim_in + hidden

    key = jax.random.PRNGKey(0)
    kx, ks, ka1, ka2, kwg, kwu = jax.random.split(key, 6)

    x = jax.random.normal(kx, (batch, node_num, dim_in), dtype=jnp.float32)
    state = jax.random.normal(ks, (batch, node_num, hidden), dtype=jnp.float32)

    # Two row-normalized random supports (MegaCRN-style learned adjacencies).
    a1 = jax.nn.softmax(jax.random.normal(ka1, (node_num, node_num)), axis=-1)
    a2 = jax.nn.softmax(jax.random.normal(ka2, (node_num, node_num)), axis=-1)
    supports_stacked = build_cheb_supports([a1, a2], cheb_k)   # (2*cheb_k, N, N)
    S = supports_stacked.shape[0]

    # AGCN parameters (xavier_normal weights / zero bias, as in the PyTorch init).
    wg = xavier_normal(kwg, (S * cat_dim, 2 * hidden))
    bg = jnp.zeros((1, 2 * hidden), dtype=jnp.float32)
    wu = xavier_normal(kwu, (S * cat_dim, hidden))
    bu = jnp.zeros((1, hidden), dtype=jnp.float32)

    # One-time packing (hoisted out of the per-timestep call).
    sup_rows, w_big, w_c, bias = prepare_agcrn_params(
        supports_stacked, wg, bg, wu, bu, dim_in, hidden)

    h = agcrn_cell(x, state, sup_rows, w_big, w_c, bias)
    h = jax.block_until_ready(h)

    # Reference computed from the same bf16-rounded operands the kernel feeds the
    # MXU; tolerance additionally covers the kernel's bf16 rounding of the
    # graph-conv intermediates.
    def rbf16(a):
        return a.astype(jnp.bfloat16).astype(jnp.float32)

    h_ref = ref_agcrn_cell(rbf16(x), rbf16(state), rbf16(supports_stacked),
                           rbf16(wg), bg, rbf16(wu), bu, hidden)

    assert h.shape == (batch, node_num, hidden)
    assert jnp.allclose(h, h_ref, atol=6e-2, rtol=6e-2), \
        float(jnp.max(jnp.abs(h - h_ref)))

    print("KERNEL_OK")
</pallas_src>

<mosaic_0001>
module attributes {stable_mosaic.version = 11 : i64} {
  func.func @_agcrn_cell_kernel(%arg0: i32, %arg1: memref<1x16x12xbf16, #tpu.memory_space<vmem>>, %arg2: memref<96x16xbf16, #tpu.memory_space<vmem>>, %arg3: memref<72x24xbf16, #tpu.memory_space<vmem>>, %arg4: memref<48x8xbf16, #tpu.memory_space<vmem>>, %arg5: memref<1x24xf32, #tpu.memory_space<vmem>>, %arg6: memref<1x16x8xf32, #tpu.memory_space<vmem>>, %arg7: memref<16x72xbf16, #tpu.memory_space<vmem>>, %arg8: memref<16x48xbf16, #tpu.memory_space<vmem>>) attributes {dimension_semantics = [#tpu.dimension_semantics<parallel>], iteration_bounds = array<i64: 2>, scalar_prefetch = 0 : i64, scratch_operands = 2 : i64, tpu.core_type = #tpu.core_type<tc>, window_params = [{transform_indices = @transform_0, window_bounds = array<i64: 1, 16, 12>}, {pipeline_mode = #tpu.pipeline_mode<synchronous>, transform_indices = @transform_1, window_bounds = array<i64: 96, 16>}, {pipeline_mode = #tpu.pipeline_mode<synchronous>, transform_indices = @transform_2, window_bounds = array<i64: 72, 24>}, {pipeline_mode = #tpu.pipeline_mode<synchronous>, transform_indices = @transform_3, window_bounds = array<i64: 48, 8>}, {pipeline_mode = #tpu.pipeline_mode<synchronous>, transform_indices = @transform_4, window_bounds = array<i64: 1, 24>}, {transform_indices = @transform_5, window_bounds = array<i64: 1, 16, 8>}]} {
    %c0 = arith.constant 0 : index
    %c0_0 = arith.constant 0 : index
    %c0_1 = arith.constant 0 : index
    %0 = vector.load %arg1[%c0, %c0_0, %c0_1] : memref<1x16x12xbf16, #tpu.memory_space<vmem>>, vector<1x16x12xbf16>
    %1 = vector.shape_cast %0 : vector<1x16x12xbf16> to vector<16x12xbf16>
    %c0_2 = arith.constant 0 : index
    %c0_3 = arith.constant 0 : index
    %2 = vector.load %arg2[%c0_2, %c0_3] : memref<96x16xbf16, #tpu.memory_space<vmem>>, vector<96x16xbf16>
    %cst = arith.constant dense<0.000000e+00> : vector<96x12xf32>
    %3 = tpu.matmul %2, %1, %cst {dimension_numbers = #tpu.dot_dimension_numbers<[1], [0], [0], [1], [0, 0, 1, 1], [], []>} : vector<96x16xbf16>, vector<16x12xbf16>, vector<96x12xf32> -> vector<96x12xf32>
    %4 = vector.extract_strided_slice %3 {offsets = [0, 0], sizes = [16, 12], strides = [1, 1]} : vector<96x12xf32> to vector<16x12xf32>
    %5 = arith.truncf %4 : vector<16x12xf32> to vector<16x12xbf16>
    %c0_4 = arith.constant 0 : index
    %c0_5 = arith.constant 0 : index
    %6 = vector.load %arg7[%c0_4, %c0_5] : memref<16x72xbf16, #tpu.memory_space<vmem>>, vector<16x12xbf16>
    tpu.vector_store %arg7[%c0_4, %c0_5], %5 {strides = array<i32>} : memref<16x72xbf16, #tpu.memory_space<vmem>>, vector<16x12xbf16>,
    %7 = vector.extract_strided_slice %3 {offsets = [16, 0], sizes = [16, 12], strides = [1, 1]} : vector<96x12xf32> to vector<16x12xf32>
    %8 = arith.truncf %7 : vector<16x12xf32> to vector<16x12xbf16>
    %c0_6 = arith.constant 0 : index
    %c12 = arith.constant 12 : index
    %9 = vector.load %arg7[%c0_6, %c12] : memref<16x72xbf16, #tpu.memory_space<vmem>>, vector<16x12xbf16>
    tpu.vector_store %arg7[%c0_6, %c12], %8 {strides = array<i32>} : memref<16x72xbf16, #tpu.memory_space<vmem>>, vector<16x12xbf16>,
    %10 = vector.extract_strided_slice %3 {offsets = [32, 0], sizes = [16, 12], strides = [1, 1]} : vector<96x12xf32> to vector<16x12xf32>
    %11 = arith.truncf %10 : vector<16x12xf32> to vector<16x12xbf16>
    %c0_7 = arith.constant 0 : index
    %c24 = arith.constant 24 : index
    %12 = vector.load %arg7[%c0_7, %c24] : memref<16x72xbf16, #tpu.memory_space<vmem>>, vector<16x12xbf16>
    tpu.vector_store %arg7[%c0_7, %c24], %11 {strides = array<i32>} : memref<16x72xbf16, #tpu.memory_space<vmem>>, vector<16x12xbf16>,
    %13 = vector.extract_strided_slice %3 {offsets = [48, 0], sizes = [16, 12], strides = [1, 1]} : vector<96x12xf32> to vector<16x12xf32>
    %14 = arith.truncf %13 : vector<16x12xf32> to vector<16x12xbf16>
    %c0_8 = arith.constant 0 : index
    %c36 = arith.constant 36 : index
    %15 = vector.load %arg7[%c0_8, %c36] : memref<16x72xbf16, #tpu.memory_space<vmem>>, vector<16x12xbf16>
    tpu.vector_store %arg7[%c0_8, %c36], %14 {strides = array<i32>} : memref<16x72xbf16, #tpu.memory_space<vmem>>, vector<16x12xbf16>,
    %16 = vector.extract_strided_slice %3 {offsets = [64, 0], sizes = [16, 12], strides = [1, 1]} : vector<96x12xf32> to vector<16x12xf32>
    %17 = arith.truncf %16 : vector<16x12xf32> to vector<16x12xbf16>
    %c0_9 = arith.constant 0 : index
    %c48 = arith.constant 48 : index
    %18 = vector.load %arg7[%c0_9, %c48] : memref<16x72xbf16, #tpu.memory_space<vmem>>, vector<16x12xbf16>
    tpu.vector_store %arg7[%c0_9, %c48], %17 {strides = array<i32>} : memref<16x72xbf16, #tpu.memory_space<vmem>>, vector<16x12xbf16>,
    %19 = vector.extract_strided_slice %3 {offsets = [80, 0], sizes = [16, 12], strides = [1, 1]} : vector<96x12xf32> to vector<16x12xf32>
    %20 = arith.truncf %19 : vector<16x12xf32> to vector<16x12xbf16>
    %c0_10 = arith.constant 0 : index
    %c60 = arith.constant 60 : index
    %21 = vector.load %arg7[%c0_10, %c60] : memref<16x72xbf16, #tpu.memory_space<vmem>>, vector<16x12xbf16>
    tpu.vector_store %arg7[%c0_10, %c60], %20 {strides = array<i32>} : memref<16x72xbf16, #tpu.memory_space<vmem>>, vector<16x12xbf16>,
    %c0_11 = arith.constant 0 : index
    %c0_12 = arith.constant 0 : index
    %22 = vector.load %arg7[%c0_11, %c0_12] : memref<16x72xbf16, #tpu.memory_space<vmem>>, vector<16x72xbf16>
    %c0_13 = arith.constant 0 : index
    %c0_14 = arith.constant 0 : index
    %23 = vector.load %arg3[%c0_13, %c0_14] : memref<72x24xbf16, #tpu.memory_space<vmem>>, vector<72x24xbf16>
    %cst_15 = arith.constant dense<0.000000e+00> : vector<16x24xf32>
    %24 = tpu.matmul %22, %23, %cst_15 {dimension_numbers = #tpu.dot_dimension_numbers<[1], [0], [0], [1], [0, 0, 1, 1], [], []>} : vector<16x72xbf16>, vector<72x24xbf16>, vector<16x24xf32> -> vector<16x24xf32>
    %c0_16 = arith.constant 0 : index
    %c0_17 = arith.constant 0 : index
    %25 = vector.load %arg5[%c0_16, %c0_17] : memref<1x24xf32, #tpu.memory_space<vmem>>, vector<1x24xf32>
    %26 = vector.broadcast %25 : vector<1x24xf32> to vector<16x24xf32>
    %27 = arith.addf %24, %26 : vector<16x24xf32>
    %28 = vector.extract_strided_slice %27 {offsets = [0, 0], sizes = [16, 8], strides = [1, 1]} : vector<16x24xf32> to vector<16x8xf32>
    %29 = arith.negf %28 : vector<16x8xf32>
    %30 = math.exp %29 : vector<16x8xf32>
    %cst_18 = arith.constant 1.000000e+00 : f32
    %31 = vector.broadcast %cst_18 : f32 to vector<16x8xf32>
    %32 = arith.addf %31, %30 : vector<16x8xf32>
    %33 = arith.divf %31, %32 : vector<16x8xf32>
    %34 = vector.extract_strided_slice %27 {offsets = [0, 8], sizes = [16, 8], strides = [1, 1]} : vector<16x24xf32> to vector<16x8xf32>
    %35 = arith.negf %34 : vector<16x8xf32>
    %36 = math.exp %35 : vector<16x8xf32>
    %cst_19 = arith.constant 1.000000e+00 : f32
    %37 = vector.broadcast %cst_19 : f32 to vector<16x8xf32>
    %38 = arith.addf %37, %36 : vector<16x8xf32>
    %39 = arith.divf %37, %38 : vector<16x8xf32>
    %40 = vector.extract_strided_slice %1 {offsets = [0, 4], sizes = [16, 8], strides = [1, 1]} : vector<16x12xbf16> to vector<16x8xbf16>
    %41 = arith.extf %40 : vector<16x8xbf16> to vector<16x8xf32>
    %42 = arith.mulf %33, %41 : vector<16x8xf32>
    %43 = arith.truncf %42 : vector<16x8xf32> to vector<16x8xbf16>
    %cst_20 = arith.constant dense<0.000000e+00> : vector<96x8xf32>
    %44 = tpu.matmul %2, %43, %cst_20 {dimension_numbers = #tpu.dot_dimension_numbers<[1], [0], [0], [1], [0, 0, 1, 1], [], []>} : vector<96x16xbf16>, vector<16x8xbf16>, vector<96x8xf32> -> vector<96x8xf32>
    %45 = vector.extract_strided_slice %44 {offsets = [0, 0], sizes = [16, 8], strides = [1, 1]} : vector<96x8xf32> to vector<16x8xf32>
    %46 = arith.truncf %45 : vector<16x8xf32> to vector<16x8xbf16>
    %c0_21 = arith.constant 0 : index
    %c0_22 = arith.constant 0 : index
    %47 = vector.load %arg8[%c0_21, %c0_22] : memref<16x48xbf16, #tpu.memory_space<vmem>>, vector<16x8xbf16>
    tpu.vector_store %arg8[%c0_21, %c0_22], %46 {strides = array<i32>} : memref<16x48xbf16, #tpu.memory_space<vmem>>, vector<16x8xbf16>,
    %48 = vector.extract_strided_slice %44 {offsets = [16, 0], sizes = [16, 8], strides = [1, 1]} : vector<96x8xf32> to vector<16x8xf32>
    %49 = arith.truncf %48 : vector<16x8xf32> to vector<16x8xbf16>
    %c0_23 = arith.constant 0 : index
    %c8 = arith.constant 8 : index
    %50 = vector.load %arg8[%c0_23, %c8] : memref<16x48xbf16, #tpu.memory_space<vmem>>, vector<16x8xbf16>
    tpu.vector_store %arg8[%c0_23, %c8], %49 {strides = array<i32>} : memref<16x48xbf16, #tpu.memory_space<vmem>>, vector<16x8xbf16>,
    %51 = vector.extract_strided_slice %44 {offsets = [32, 0], sizes = [16, 8], strides = [1, 1]} : vector<96x8xf32> to vector<16x8xf32>
    %52 = arith.truncf %51 : vector<16x8xf32> to vector<16x8xbf16>
    %c0_24 = arith.constant 0 : index
    %c16 = arith.constant 16 : index
    %53 = vector.load %arg8[%c0_24, %c16] : memref<16x48xbf16, #tpu.memory_space<vmem>>, vector<16x8xbf16>
    tpu.vector_store %arg8[%c0_24, %c16], %52 {strides = array<i32>} : memref<16x48xbf16, #tpu.memory_space<vmem>>, vector<16x8xbf16>,
    %54 = vector.extract_strided_slice %44 {offsets = [48, 0], sizes = [16, 8], strides = [1, 1]} : vector<96x8xf32> to vector<16x8xf32>
    %55 = arith.truncf %54 : vector<16x8xf32> to vector<16x8xbf16>
    %c0_25 = arith.constant 0 : index
    %c24_26 = arith.constant 24 : index
    %56 = vector.load %arg8[%c0_25, %c24_26] : memref<16x48xbf16, #tpu.memory_space<vmem>>, vector<16x8xbf16>
    tpu.vector_store %arg8[%c0_25, %c24_26], %55 {strides = array<i32>} : memref<16x48xbf16, #tpu.memory_space<vmem>>, vector<16x8xbf16>,
    %57 = vector.extract_strided_slice %44 {offsets = [64, 0], sizes = [16, 8], strides = [1, 1]} : vector<96x8xf32> to vector<16x8xf32>
    %58 = arith.truncf %57 : vector<16x8xf32> to vector<16x8xbf16>
    %c0_27 = arith.constant 0 : index
    %c32 = arith.constant 32 : index
    %59 = vector.load %arg8[%c0_27, %c32] : memref<16x48xbf16, #tpu.memory_space<vmem>>, vector<16x8xbf16>
    tpu.vector_store %arg8[%c0_27, %c32], %58 {strides = array<i32>} : memref<16x48xbf16, #tpu.memory_space<vmem>>, vector<16x8xbf16>,
    %60 = vector.extract_strided_slice %44 {offsets = [80, 0], sizes = [16, 8], strides = [1, 1]} : vector<96x8xf32> to vector<16x8xf32>
    %61 = arith.truncf %60 : vector<16x8xf32> to vector<16x8xbf16>
    %c0_28 = arith.constant 0 : index
    %c40 = arith.constant 40 : index
    %62 = vector.load %arg8[%c0_28, %c40] : memref<16x48xbf16, #tpu.memory_space<vmem>>, vector<16x8xbf16>
    tpu.vector_store %arg8[%c0_28, %c40], %61 {strides = array<i32>} : memref<16x48xbf16, #tpu.memory_space<vmem>>, vector<16x8xbf16>,
    %c0_29 = arith.constant 0 : index
    %c0_30 = arith.constant 0 : index
    %63 = vector.load %arg8[%c0_29, %c0_30] : memref<16x48xbf16, #tpu.memory_space<vmem>>, vector<16x48xbf16>
    %64 = vector.extract_strided_slice %27 {offsets = [0, 16], sizes = [16, 8], strides = [1, 1]} : vector<16x24xf32> to vector<16x8xf32>
    %c0_31 = arith.constant 0 : index
    %c0_32 = arith.constant 0 : index
    %65 = vector.load %arg4[%c0_31, %c0_32] : memref<48x8xbf16, #tpu.memory_space<vmem>>, vector<48x8xbf16>
    %cst_33 = arith.constant dense<0.000000e+00> : vector<16x8xf32>
    %66 = tpu.matmul %63, %65, %cst_33 {dimension_numbers = #tpu.dot_dimension_numbers<[1], [0], [0], [1], [0, 0, 1, 1], [], []>} : vector<16x48xbf16>, vector<48x8xbf16>, vector<16x8xf32> -> vector<16x8xf32>
    %67 = arith.addf %64, %66 : vector<16x8xf32>
    %68 = math.tanh %67 : vector<16x8xf32>
    %69 = arith.mulf %39, %41 : vector<16x8xf32>
    %cst_34 = arith.constant 1.000000e+00 : f32
    %70 = vector.broadcast %cst_34 : f32 to vector<16x8xf32>
    %71 = arith.subf %70, %39 : vector<16x8xf32>
    %72 = arith.mulf %71, %68 : vector<16x8xf32>
    %73 = arith.addf %69, %72 : vector<16x8xf32>
    %c0_35 = arith.constant 0 : index
    %c0_36 = arith.constant 0 : index
    %c0_37 = arith.constant 0 : index
    %74 = vector.load %arg6[%c0_35, %c0_36, %c0_37] : memref<1x16x8xf32, #tpu.memory_space<vmem>>, vector<1x16x8xf32>
    %75 = vector.shape_cast %74 : vector<1x16x8xf32> to vector<16x8xf32>
    %76 = vector.shape_cast %73 : vector<16x8xf32> to vector<1x16x8xf32>
    tpu.vector_store %arg6[%c0_35, %c0_36, %c0_37], %76 {strides = array<i32>} : memref<1x16x8xf32, #tpu.memory_space<vmem>>, vector<1x16x8xf32>,
    return
  }
  func.func @transform_0(%arg0: i32) -> (i32, i32, i32) {
    %c0_i32 = arith.constant 0 : i32
    %c0_i32_0 = arith.constant 0 : i32
    %c0_i32_1 = arith.constant 0 : i32
    return %arg0, %c0_i32, %c0_i32_0 : i32, i32, i32
  }
  func.func @transform_1(%arg0: i32) -> (i32, i32) {
    %c0_i32 = arith.constant 0 : i32
    %c0_i32_0 = arith.constant 0 : i32
    %c0_i32_1 = arith.constant 0 : i32
    return %c0_i32, %c0_i32_0 : i32, i32
  }
  func.func @transform_2(%arg0: i32) -> (i32, i32) {
    %c0_i32 = arith.constant 0 : i32
    %c0_i32_0 = arith.constant 0 : i32
    %c0_i32_1 = arith.constant 0 : i32
    return %c0_i32, %c0_i32_0 : i32, i32
  }
  func.func @transform_3(%arg0: i32) -> (i32, i32) {
    %c0_i32 = arith.constant 0 : i32
    %c0_i32_0 = arith.constant 0 : i32
    %c0_i32_1 = arith.constant 0 : i32
    return %c0_i32, %c0_i32_0 : i32, i32
  }
  func.func @transform_4(%arg0: i32) -> (i32, i32) {
    %c0_i32 = arith.constant 0 : i32
    %c0_i32_0 = arith.constant 0 : i32
    %c0_i32_1 = arith.constant 0 : i32
    return %c0_i32, %c0_i32_0 : i32, i32
  }
  func.func @transform_5(%arg0: i32) -> (i32, i32, i32) {
    %c0_i32 = arith.constant 0 : i32
    %c0_i32_0 = arith.constant 0 : i32
    %c0_i32_1 = arith.constant 0 : i32
    return %arg0, %c0_i32, %c0_i32_0 : i32, i32, i32
  }
}

</mosaic_0001>

<llo_original>
// kernel: agcrn_cell.1
$region0: #{agcrn_cell.1}
  #allocation0 [shape = 'u32[]', space=smem, size = 0x4, offset = 0x4, fixed_abs, tag = 'smem constant byte address 0x4 - core index']
  #allocation1 [shape = 'u32[144,128]{1,0:T(1,128)}', space=vmem, size = 0x12000, scoped, tag = 'internal scratch']
  #allocation2 [shape = 'bf16[16,72]{1,0:T(8,128)(2,1)}', space=vmem, size = 0x1000, scoped, tag = 'scratch operand']
  #allocation3 [shape = 'bf16[16,48]{1,0:T(8,128)(2,1)}', space=vmem, size = 0x1000, scoped, tag = 'scratch operand']
  %s0 = inlined_call_operand.vmem [shape: bf16[2,16,12], index: 0, kind: input, shape index: {}]
  %s1 = inlined_call_operand.vmem [shape: bf16[96,16], index: 1, kind: input, shape index: {}]
  %s2 = inlined_call_operand.vmem [shape: bf16[72,24], index: 2, kind: input, shape index: {}]
  %s3 = inlined_call_operand.vmem [shape: bf16[48,8], index: 3, kind: input, shape index: {}]
  %s4 = inlined_call_operand.vmem [shape: f32[1,24], index: 4, kind: input, shape index: {}]
  %s5 = inlined_call_operand.vmem [shape: f32[2,16,8], index: 5, kind: output, shape index: {}]
  %s6 = sld [smem:[#allocation0]]
  $region53: #{agcrn_cell.1} parent=0
    _
  %s8 = ssub.s32 1, %s6
  %s9 = scalar_select 0, %s8, %s6
  loop: start=0, step=1, limit=4
  $region2: #{agcrn_cell.1} parent=0 // loop_pre_header
    _
  $region3: #{agcrn_cell.1} parent=0 // loop_header
    %s11 = sphi 0, %s15
    %p12 = scmp.ge.s32.totalorder %s11, 4
    %s21 = sphi 0, %s23
    %s24 = sphi 0, %s21
    %s25 = sphi 0, %s24
    %s41 = sphi 0, %s25
    %s45 = sphi 0, %s45
    %s47 = sphi 0, %s45
    %s48 = sphi 0, %s47
    %s62 = sphi 0, %s48
    %s66 = sphi 0, %s66
    %s68 = sphi 0, %s66
    %s69 = sphi 0, %s68
    %s83 = sphi 0, %s69
    %s87 = sphi 0, %s87
    %s89 = sphi 0, %s87
    %s90 = sphi 0, %s89
    %s104 = sphi 0, %s90
    %s108 = sphi 0, %s108
    %s110 = sphi 0, %s108
    %s111 = sphi 0, %s110
    %s125 = sphi 0, %s111
    %s131 = sphi 0, %s133
    %s134 = sphi 0, %s131
    %s135 = sphi 0, %s134
    %s151 = sphi 0, %s135
  $region4: #{agcrn_cell.1} parent=0 // loop_header_branch
    %14 = sbr.rel (%p12) target = $region8
  $region5: #{agcrn_cell.1} parent=0 // loop_body
    %s16 = ssub.s32 %s11, 1
    %s17 = ssub.s32 %s11, 2
    %s18 = sadd.s32 %s11, 1
    %s19 = ssub.s32 %s11, %s18
    %p20 = scmp.eq.s32.totalorder %s19, 0
    %s22 = sadd.s32 %s21, 1
    %s23 = scalar_select %p20, %s21, %s22
    %p26 = pneg %p20
    %p27 = scmp.eq.s32.totalorder %s11, 1
    %p28 = por %p26, %p27
    %p29 = scmp.ne.s32.totalorder %s21, %s24
    %p30 = scmp.eq.s32.totalorder %s11, 0
    %p31 = por %p29, %p30
    %p32 = scmp.ne.s32.totalorder %s21, %s24
    %p33 = scmp.eq.s32.totalorder %s16, 1
    %p34 = por %p32, %p33
    %p35 = scmp.ne.s32.totalorder %s24, %s25
    %p36 = scmp.eq.s32.totalorder %s16, 0
    %p37 = por %p35, %p36
    %p38 = scmp.ne.s32.totalorder %s24, %s25
    %p39 = scmp.eq.s32.totalorder %s17, 1
    %p40 = por %p38, %p39
    %p42 = scmp.ne.s32.totalorder %s25, %s41
    %p43 = scmp.eq.s32.totalorder %s17, 0
    %p44 = por %p42, %p43
    %s46 = sadd.s32 %s45, 1
    %p49 = scmp.eq.s32.totalorder %s11, 1
    %p50 = scmp.ne.s32.totalorder %s45, %s47
    %p51 = scmp.eq.s32.totalorder %s11, 0
    %p52 = por %p50, %p51
    %p53 = scmp.ne.s32.totalorder %s45, %s47
    %p54 = scmp.eq.s32.totalorder %s16, 1
    %p55 = por %p53, %p54
    %p56 = scmp.ne.s32.totalorder %s47, %s48
    %p57 = scmp.eq.s32.totalorder %s16, 0
    %p58 = por %p56, %p57
    %p59 = scmp.ne.s32.totalorder %s47, %s48
    %p60 = scmp.eq.s32.totalorder %s17, 1
    %p61 = por %p59, %p60
    %p63 = scmp.ne.s32.totalorder %s48, %s62
    %p64 = scmp.eq.s32.totalorder %s17, 0
    %p65 = por %p63, %p64
    %s67 = sadd.s32 %s66, 1
    %p70 = scmp.eq.s32.totalorder %s11, 1
    %p71 = scmp.ne.s32.totalorder %s66, %s68
    %p72 = scmp.eq.s32.totalorder %s11, 0
    %p73 = por %p71, %p72
    %p74 = scmp.ne.s32.totalorder %s66, %s68
    %p75 = scmp.eq.s32.totalorder %s16, 1
    %p76 = por %p74, %p75
    %p77 = scmp.ne.s32.totalorder %s68, %s69
    %p78 = scmp.eq.s32.totalorder %s16, 0
    %p79 = por %p77, %p78
    %p80 = scmp.ne.s32.totalorder %s68, %s69
    %p81 = scmp.eq.s32.totalorder %s17, 1
    %p82 = por %p80, %p81
    %p84 = scmp.ne.s32.totalorder %s69, %s83
    %p85 = scmp.eq.s32.totalorder %s17, 0
    %p86 = por %p84, %p85
    %s88 = sadd.s32 %s87, 1
    %p91 = scmp.eq.s32.totalorder %s11, 1
    %p92 = scmp.ne.s32.totalorder %s87, %s89
    %p93 = scmp.eq.s32.totalorder %s11, 0
    %p94 = por %p92, %p93
    %p95 = scmp.ne.s32.totalorder %s87, %s89
    %p96 = scmp.eq.s32.totalorder %s16, 1
    %p97 = por %p95, %p96
    %p98 = scmp.ne.s32.totalorder %s89, %s90
    %p99 = scmp.eq.s32.totalorder %s16, 0
    %p100 = por %p98, %p99
    %p101 = scmp.ne.s32.totalorder %s89, %s90
    %p102 = scmp.eq.s32.totalorder %s17, 1
    %p103 = por %p101, %p102
    %p105 = scmp.ne.s32.totalorder %s90, %s104
    %p106 = scmp.eq.s32.totalorder %s17, 0
    %p107 = por %p105, %p106
    %s109 = sadd.s32 %s108, 1
    %p112 = scmp.eq.s32.totalorder %s11, 1
    %p113 = scmp.ne.s32.totalorder %s108, %s110
    %p114 = scmp.eq.s32.totalorder %s11, 0
    %p115 = por %p113, %p114
    %p116 = scmp.ne.s32.totalorder %s108, %s110
    %p117 = scmp.eq.s32.totalorder %s16, 1
    %p118 = por %p116, %p117
    %p119 = scmp.ne.s32.totalorder %s110, %s111
    %p120 = scmp.eq.s32.totalorder %s16, 0
    %p121 = por %p119, %p120
    %p122 = scmp.ne.s32.totalorder %s110, %s111
    %p123 = scmp.eq.s32.totalorder %s17, 1
    %p124 = por %p122, %p123
    %p126 = scmp.ne.s32.totalorder %s111, %s125
    %p127 = scmp.eq.s32.totalorder %s17, 0
    %p128 = por %p126, %p127
    %s129 = ssub.s32 %s11, %s18
    %p130 = scmp.eq.s32.totalorder %s129, 0
    %s132 = sadd.s32 %s131, 1
    %s133 = scalar_select %p130, %s131, %s132
    %p136 = pneg %p130
    %p137 = scmp.eq.s32.totalorder %s11, 1
    %p138 = por %p136, %p137
    %p139 = scmp.ne.s32.totalorder %s131, %s134
    %p140 = scmp.eq.s32.totalorder %s11, 0
    %p141 = por %p139, %p140
    %p142 = scmp.ne.s32.totalorder %s131, %s134
    %p143 = scmp.eq.s32.totalorder %s16, 1
    %p144 = por %p142, %p143
    %p145 = scmp.ne.s32.totalorder %s134, %s135
    %p146 = scmp.eq.s32.totalorder %s16, 0
    %p147 = por %p145, %p146
    %p148 = scmp.ne.s32.totalorder %s134, %s135
    %p149 = scmp.eq.s32.totalorder %s17, 1
    %p150 = por %p148, %p149
    %p152 = scmp.ne.s32.totalorder %s135, %s151
    %p153 = scmp.eq.s32.totalorder %s17, 0
    %p154 = por %p152, %p153
    %p155 = scmp.le.s32.totalorder 1, %s11
    %p156 = scmp.lt.s32.totalorder %s11, 3
    %p157 = pnand %p155, %p156
    %p158 = pneg %p157
    // Predicated region
    $region9: #{agcrn_cell.1} parent=5 // pred_check
      _
    $region10: #{agcrn_cell.1} parent=5 // pred_check_branch
      %160 = sbr.rel (%p157) target = $region12
    $region11: #{agcrn_cell.1} parent=5 // pred_region
      %s161 = ssub.s32 %s11, 1
      // Predicated region
      $region13: #{agcrn_cell.1} parent=11 // pred_check
        %p162 = pneg %p58
      $region14: #{agcrn_cell.1} parent=11 // pred_check_branch
        %164 = sbr.rel (%p162) target = $region16
      $region15: #{agcrn_cell.1} parent=11 // pred_region
        _
      $region16: #{agcrn_cell.1} parent=11 // pred_fallthru
        _
      // Predicated region
      $region17: #{agcrn_cell.1} parent=11 // pred_check
        %p165 = pneg %p79
      $region18: #{agcrn_cell.1} parent=11 // pred_check_branch
        %167 = sbr.rel (%p165) target = $region20
      $region19: #{agcrn_cell.1} parent=11 // pred_region
        _
      $region20: #{agcrn_cell.1} parent=11 // pred_fallthru
        _
      // Predicated region
      $region21: #{agcrn_cell.1} parent=11 // pred_check
        %p168 = pneg %p100
      $region22: #{agcrn_cell.1} parent=11 // pred_check_branch
        %170 = sbr.rel (%p168) target = $region24
      $region23: #{agcrn_cell.1} parent=11 // pred_region
        _
      $region24: #{agcrn_cell.1} parent=11 // pred_fallthru
        _
      // Predicated region
      $region25: #{agcrn_cell.1} parent=11 // pred_check
        %p171 = pneg %p121
      $region26: #{agcrn_cell.1} parent=11 // pred_check_branch
        %173 = sbr.rel (%p171) target = $region28
      $region27: #{agcrn_cell.1} parent=11 // pred_region
        _
      $region28: #{agcrn_cell.1} parent=11 // pred_fallthru
        _
    $region12: #{agcrn_cell.1} parent=5 // pred_fallthru
      _
    %p174 = scmp.lt.s32.totalorder %s11, 2
    // Predicated region
    $region29: #{agcrn_cell.1} parent=5 // pred_check
      %p175 = pneg %p174
    $region30: #{agcrn_cell.1} parent=5 // pred_check_branch
      %177 = sbr.rel (%p175) target = $region32
    $region31: #{agcrn_cell.1} parent=5 // pred_region
      // Predicated region
      $region33: #{agcrn_cell.1} parent=31 // pred_check
        %p178 = pneg %p31
      $region34: #{agcrn_cell.1} parent=31 // pred_check_branch
        %180 = sbr.rel (%p178) target = $region36
      $region35: #{agcrn_cell.1} parent=31 // pred_region
        %p181 = scmp.lt.s32.totalorder %s11, 1
        %s182 = scalar_select %p181, %s11, 1
        %s183 = smul.addr %s182, 2
        %s184 = smul.addr %s183, 4
        %s185 = scalar_lea.vmem %s0, %s184
      $region36: #{agcrn_cell.1} parent=31 // pred_fallthru
        _
    $region32: #{agcrn_cell.1} parent=5 // pred_fallthru
      _
    %p186 = scmp.le.s32.totalorder 1, %s11
    %p187 = scmp.lt.s32.totalorder %s11, 3
    %p188 = pnand %p186, %p187
    %p189 = pneg %p188
    // Predicated region
    $region37: #{agcrn_cell.1} parent=5 // pred_check
      _
    $region38: #{agcrn_cell.1} parent=5 // pred_check_branch
      %191 = sbr.rel (%p188) target = $region40
    $region39: #{agcrn_cell.1} parent=5 // pred_region
      %s192 = ssub.s32 %s11, 1
      %p193 = scmp.lt.s32.totalorder %s16, 1
      %s194 = scalar_select %p193, %s16, 1
      %s195 = smul.addr %s194, 2
      %s196 = smul.addr %s195, 4
      %s197 = scalar_lea.vmem %s0, %s196
      %p198 = pneg %p37
      %p199 = pneg %p34
      %p200 = pneg %p58
      %p201 = pneg %p55
      %p202 = pneg %p79
      %p203 = pneg %p76
      %p204 = pneg %p100
      %p205 = pneg %p97
      %p206 = pneg %p121
      %p207 = pneg %p118
      %p208 = pneg %p147
      %p209 = pneg %p144
      %p210 = scmp.lt.s32.totalorder %s16, 1
      %s211 = scalar_select %p210, %s16, 1
      %s212 = smul.addr %s211, 2
      %s213 = smul.addr %s212, 8
      %s214 = scalar_lea.vmem %s5, %s213
      %p215 = scmp.lt.s32.totalorder %s16, 1
      %s216 = scalar_select %p215, %s16, 1
      %s217 = smul.addr %s216, 2
      %s218 = smul.addr %s217, 4
      %s219 = scalar_lea.vmem %s0, %s218
      %p220 = scmp.lt.s32.totalorder %s16, 1
      %s221 = scalar_select %p220, %s16, 1
      %s222 = smul.addr %s221, 2
      %s223 = smul.addr %s222, 8
      %s224 = scalar_lea.vmem %s5, %s223
      %v226 = vld [vmem:[%s219] sm:$0xf]
      %v227 = vld [vmem:[%s219 + $0x4] sm:$0xf]
      %v228 = vld [vmem:[%s1] sm:$0xf]
      %v229 = vld [vmem:[%s1 + $0x4] sm:$0xf]
      %v230 = vld [vmem:[%s1 + $0x8] sm:$0xf]
      %v231 = vld [vmem:[%s1 + $0xc] sm:$0xf]
      %v232 = vld [vmem:[%s1 + $0x10] sm:$0xf]
      %v233 = vld [vmem:[%s1 + $0x14] sm:$0xf]
      %v234 = vld [vmem:[%s1 + $0x18] sm:$0xf]
      %v235 = vld [vmem:[%s1 + $0x1c] sm:$0xf]
      %v236 = vld [vmem:[%s1 + $0x20] sm:$0xf]
      %v237 = vld [vmem:[%s1 + $0x24] sm:$0xf]
      %v238 = vld [vmem:[%s1 + $0x28] sm:$0xf]
      %v239 = vld [vmem:[%s1 + $0x2c] sm:$0xf]
      %v252 = vunpack.c.l.b16 %v228
      %v253 = vunpack.c.l.b16 %v229
      %v254 = vunpack.c.l.b16 %v230
      %v255 = vunpack.c.l.b16 %v231
      %v256 = vunpack.c.l.b16 %v232
      %v257 = vunpack.c.l.b16 %v233
      %v258 = vunpack.c.l.b16 %v234
      %v259 = vunpack.c.l.b16 %v235
      %v260 = vunpack.c.l.b16 %v236
      %v261 = vunpack.c.l.b16 %v237
      %v262 = vunpack.c.l.b16 %v238
      %v263 = vunpack.c.l.b16 %v239
      %v264 = vpack.c.b16 %v253, %v252
      %v265 = vpack.c.b16 %v255, %v254
      %v266 = vpack.c.b16 %v257, %v256
      %v267 = vpack.c.b16 %v259, %v258
      %v268 = vpack.c.b16 %v261, %v260
      %v269 = vpack.c.b16 %v263, %v262
      %v272 = vunpack.c.l.b16 %v226
      %v273 = vunpack.c.l.b16 %v227
      %v274 = vpack.c.b16 %v273, %v272
      %vm276 = vcmask 130048
      %v278 = vsel %vm276, %v264, 0
      %v281 = vsel %vm276, %v265, 0
      %v284 = vsel %vm276, %v266, 0
      %v287 = vsel %vm276, %v267, 0
      %v290 = vsel %vm276, %v268, 0
      %v293 = vsel %vm276, %v269, 0
      %295 = vmatprep.subr.bf16.mxu0 0
      %296 = vmatpush1.bf16.msra.mxu0 0
      %297 = vmatprep.subr.bf16.mxu0 0
      %298 = vmatpush1.bf16.msra.mxu0 0
      %299 = vmatprep.subr.bf16.mxu0 0
      %300 = vmatpush1.bf16.msra.mxu0 0
      %301 = vmatprep.subr.bf16.mxu0 0
      %302 = vmatpush1.bf16.msra.mxu0 0
      %303 = vmatprep.subr.bf16.mxu0 0
      %304 = vmatpush1.bf16.msra.mxu0 0
      %305 = vmatprep.subr.bf16.mxu0 0
      %306 = vmatpush1.bf16.msra.mxu0 0
      %307 = vmatprep.subr.bf16.mxu0 0
      %308 = vmatpush1.bf16.msra.mxu0 0
      %309 = vmatprep.subr.bf16.mxu0 0
      %310 = vmatpush1.bf16.msra.mxu0 %v274
      %311 = vmatprep.subr.bf16.mxu0 0
      %312 = vmatpush2.bf16.msra.mxu0 0
      %313 = vmatprep.subr.bf16.mxu0 0
      %314 = vmatpush2.bf16.msra.mxu0 0
      %315 = vmatprep.subr.bf16.mxu0 0
      %316 = vmatpush2.bf16.msra.mxu0 0
      %317 = vmatprep.subr.bf16.mxu0 0
      %318 = vmatpush2.bf16.msra.mxu0 0
      %319 = vmatprep.subr.bf16.mxu0 0
      %320 = vmatpush2.bf16.msra.mxu0 0
      %321 = vmatprep.subr.bf16.mxu0 0
      %322 = vmatpush2.bf16.msra.mxu0 0
      %323 = vmatprep.subr.bf16.mxu0 0
      %324 = vmatpush2.bf16.msra.mxu0 0
      %325 = vmatprep.subr.bf16.mxu0 0
      %326 = vmatpush2.bf16.msra.mxu0 0
      %327 = vmatprep.mubr.bf16.mxu0 0
      %328 = vmatmul.mubr.bf16.gmra.mxu0 %v278
      %v329 = vpop.f32.mrf.mxu0
      %v330 = vadd.f32 0.0, %v329
      %v331 = vpop.f32.mrf.mxu0
      %v332 = vpop.f32.mrf.mxu0
      %v333 = vadd.f32 0.0, %v332
      %v334 = vpop.f32.mrf.mxu0
      %335 = vmatprep.mubr.bf16.mxu0 0
      %336 = vmatmul.mubr.bf16.gmra.mxu0 %v281
      %v337 = vpop.f32.mrf.mxu0
      %v338 = vadd.f32 0.0, %v337
      %v339 = vpop.f32.mrf.mxu0
      %v340 = vpop.f32.mrf.mxu0
      %v341 = vadd.f32 0.0, %v340
      %v342 = vpop.f32.mrf.mxu0
      %343 = vmatprep.mubr.bf16.mxu0 0
      %344 = vmatmul.mubr.bf16.gmra.mxu0 %v284
      %v345 = vpop.f32.mrf.mxu0
      %v346 = vadd.f32 0.0, %v345
      %v347 = vpop.f32.mrf.mxu0
      %v348 = vpop.f32.mrf.mxu0
      %v349 = vadd.f32 0.0, %v348
      %v350 = vpop.f32.mrf.mxu0
      %351 = vmatprep.mubr.bf16.mxu0 0
      %352 = vmatmul.mubr.bf16.gmra.mxu0 %v287
      %v353 = vpop.f32.mrf.mxu0
      %v354 = vadd.f32 0.0, %v353
      %v355 = vpop.f32.mrf.mxu0
      %v356 = vpop.f32.mrf.mxu0
      %v357 = vadd.f32 0.0, %v356
      %v358 = vpop.f32.mrf.mxu0
      %359 = vmatprep.mubr.bf16.mxu0 0
      %360 = vmatmul.mubr.bf16.gmra.mxu0 %v290
      %v361 = vpop.f32.mrf.mxu0
      %v362 = vadd.f32 0.0, %v361
      %v363 = vpop.f32.mrf.mxu0
      %v364 = vpop.f32.mrf.mxu0
      %v365 = vadd.f32 0.0, %v364
      %v366 = vpop.f32.mrf.mxu0
      %367 = vmatprep.mubr.bf16.mxu0 0
      %368 = vmatmul.mubr.bf16.gmra.mxu0 %v293
      %v369 = vpop.f32.mrf.mxu0
      %v370 = vadd.f32 0.0, %v369
      %v371 = vpop.f32.mrf.mxu0
      %v372 = vpop.f32.mrf.mxu0
      %v373 = vadd.f32 0.0, %v372
      %v374 = vpop.f32.mrf.mxu0
      %375 = vdwg.mxu0
      %v376 = vpack.c.bf16 %v333, %v330
      %v378 = vunpack.c.l.b16 %v376
      %v379 = vunpack.c.h.b16 %v376
      %v380 = vpack.c.b16 %v378, %v378
      %v381 = vpack.c.b16 %v379, %v379
      %vm384 = vcmask 93184
      %385 = vst.msk [vmem:[#allocation2] sm:$0xf] %vm384, %v380
      %386 = vst.msk [vmem:[#allocation2 + $0x4] sm:$0xf] %vm384, %v381
      %v387 = vpack.c.bf16 %v341, %v338
      %v389 = vunpack.c.l.b16 %v387
      %v390 = vunpack.c.h.b16 %v387
      %v391 = vpack.c.b16 %v389, %v389
      %v392 = vpack.c.b16 %v390, %v390
      %393 = vrot.lane.b32.xlu0 %v391, 12
      %v394 = vpop.permute.xlu0 %393
      %395 = vrot.lane.b32.xlu0 %v392, 12
      %v396 = vpop.permute.xlu0 %395
      %vm399 = vcmask 191584
      %400 = vst.msk [vmem:[#allocation2] sm:$0xf] %vm399, %v394
      %401 = vst.msk [vmem:[#allocation2 + $0x4] sm:$0xf] %vm399, %v396
      %v402 = vpack.c.bf16 %v349, %v346
      %v404 = vunpack.c.l.b16 %v402
      %v405 = vunpack.c.h.b16 %v402
      %v406 = vpack.c.b16 %v404, %v404
      %v407 = vpack.c.b16 %v405, %v405
      %408 = vrot.lane.b32.xlu0 %v406, 24
      %v409 = vpop.permute.xlu0 %408
      %410 = vrot.lane.b32.xlu0 %v407, 24
      %v411 = vpop.permute.xlu0 %410
      %vm414 = vcmask 289984
      %415 = vst.msk [vmem:[#allocation2] sm:$0xf] %vm414, %v409
      %416 = vst.msk [vmem:[#allocation2 + $0x4] sm:$0xf] %vm414, %v411
      %v417 = vpack.c.bf16 %v357, %v354
      %v419 = vunpack.c.l.b16 %v417
      %v420 = vunpack.c.h.b16 %v417
      %v421 = vpack.c.b16 %v419, %v419
      %v422 = vpack.c.b16 %v420, %v420
      %423 = vrot.lane.b32.xlu0 %v421, 36
      %v424 = vpop.permute.xlu0 %423
      %425 = vrot.lane.b32.xlu0 %v422, 36
      %v426 = vpop.permute.xlu0 %425
      %vm429 = vcmask 388384
      %430 = vst.msk [vmem:[#allocation2] sm:$0xf] %vm429, %v424
      %431 = vst.msk [vmem:[#allocation2 + $0x4] sm:$0xf] %vm429, %v426
      %v432 = vpack.c.bf16 %v365, %v362
      %v434 = vunpack.c.l.b16 %v432
      %v435 = vunpack.c.h.b16 %v432
      %v436 = vpack.c.b16 %v434, %v434
      %v437 = vpack.c.b16 %v435, %v435
      %438 = vrot.lane.b32.xlu0 %v436, 48
      %v439 = vpop.permute.xlu0 %438
      %440 = vrot.lane.b32.xlu0 %v437, 48
      %v441 = vpop.permute.xlu0 %440
      %vm444 = vcmask 486784
      %445 = vst.msk [vmem:[#allocation2] sm:$0xf] %vm444, %v439
      %446 = vst.msk [vmem:[#allocation2 + $0x4] sm:$0xf] %vm444, %v441
      %v447 = vpack.c.bf16 %v373, %v370
      %v449 = vunpack.c.l.b16 %v447
      %v450 = vunpack.c.h.b16 %v447
      %v451 = vpack.c.b16 %v449, %v449
      %v452 = vpack.c.b16 %v450, %v450
      %453 = vrot.lane.b32.xlu0 %v451, 60
      %v454 = vpop.permute.xlu0 %453
      %455 = vrot.lane.b32.xlu0 %v452, 60
      %v456 = vpop.permute.xlu0 %455
      %vm459 = vcmask 585184
      %460 = vst.msk [vmem:[#allocation2] sm:$0xf] %vm459, %v454
      %461 = vst.msk [vmem:[#allocation2 + $0x4] sm:$0xf] %vm459, %v456
      %v462 = vld [vmem:[#allocation2] sm:$0xf]
      %v463 = vld [vmem:[#allocation2 + $0x4] sm:$0xf]
      %v464 = vld [vmem:[%s2] sm:$0xf]
      %v465 = vld [vmem:[%s2 + $0x4] sm:$0xf]
      %v466 = vld [vmem:[%s2 + $0x8] sm:$0xf]
      %v467 = vld [vmem:[%s2 + $0xc] sm:$0xf]
      %v468 = vld [vmem:[%s2 + $0x10] sm:$0xf]
      %v469 = vld [vmem:[%s2 + $0x14] sm:$0xf]
      %v470 = vld [vmem:[%s2 + $0x18] sm:$0xf]
      %v471 = vld [vmem:[%s2 + $0x1c] sm:$0xf]
      %v472 = vld [vmem:[%s2 + $0x20] sm:$0xf]
      %v473 = vld [vmem:[%s4] sm:$0x1]
      %v475 = vlaneseq
      %v476 = vshrl.u32 %v475, 7
      %v477 = vsub.s32 0, %v476
      %v478 = vrot.slane %v473, %v477
      %v482 = vunpack.c.l.b16 %v462
      %v483 = vunpack.c.l.b16 %v463
      %v484 = vpack.c.b16 %v483, %v482
      %v494 = vunpack.c.l.b16 %v464
      %v495 = vunpack.c.l.b16 %v465
      %v496 = vunpack.c.l.b16 %v466
      %v497 = vunpack.c.l.b16 %v467
      %v498 = vunpack.c.l.b16 %v468
      %v499 = vunpack.c.l.b16 %v469
      %v500 = vunpack.c.l.b16 %v470
      %v501 = vunpack.c.l.b16 %v471
      %v502 = vunpack.c.l.b16 %v472
      %v503 = vpack.c.b16 %v495, %v494
      %v504 = vpack.c.b16 %v497, %v496
      %v505 = vpack.c.b16 %v499, %v498
      %v506 = vpack.c.b16 %v501, %v500
      %v507 = vpack.c.b16 %v502, %v502
      %vm512 = vcmask 588800
      %v514 = vsel %vm512, %v484, 0
      %vm516 = vcmask 1043456
      %v518 = vsel %vm516, %v507, 0
      %520 = vmatprep.subr.bf16.mxu0 0
      %521 = vmatpush1.bf16.msra.mxu0 0
      %522 = vmatprep.subr.bf16.mxu0 0
      %523 = vmatpush1.bf16.msra.mxu0 0
      %524 = vmatprep.subr.bf16.mxu0 0
      %525 = vmatpush1.bf16.msra.mxu0 0
      %526 = vmatprep.subr.bf16.mxu0 0
      %527 = vmatpush1.bf16.msra.mxu0 %v518
      %528 = vmatprep.subr.bf16.mxu0 0
      %529 = vmatpush1.bf16.msra.mxu0 %v506
      %530 = vmatprep.subr.bf16.mxu0 0
      %531 = vmatpush1.bf16.msra.mxu0 %v505
      %532 = vmatprep.subr.bf16.mxu0 0
      %533 = vmatpush1.bf16.msra.mxu0 %v504
      %534 = vmatprep.subr.bf16.mxu0 0
      %535 = vmatpush1.bf16.msra.mxu0 %v503
      %536 = vmatprep.subr.bf16.mxu0 0
      %537 = vmatpush2.bf16.msra.mxu0 0
      %538 = vmatprep.subr.bf16.mxu0 0
      %539 = vmatpush2.bf16.msra.mxu0 0
      %540 = vmatprep.subr.bf16.mxu0 0
      %541 = vmatpush2.bf16.msra.mxu0 0
      %542 = vmatprep.subr.bf16.mxu0 0
      %543 = vmatpush2.bf16.msra.mxu0 0
      %544 = vmatprep.subr.bf16.mxu0 0
      %545 = vmatpush2.bf16.msra.mxu0 0
      %546 = vmatprep.subr.bf16.mxu0 0
      %547 = vmatpush2.bf16.msra.mxu0 0
      %548 = vmatprep.subr.bf16.mxu0 0
      %549 = vmatpush2.bf16.msra.mxu0 0
      %550 = vmatprep.subr.bf16.mxu0 0
      %551 = vmatpush2.bf16.msra.mxu0 0
      %552 = vmatprep.mubr.bf16.mxu0 0
      %553 = vmatmul.mubr.bf16.gmra.mxu0 %v514
      %v554 = vpop.f32.mrf.mxu0
      %v555 = vadd.f32 %v478, %v554
      %v556 = vpop.f32.mrf.mxu0
      %v557 = vpop.f32.mrf.mxu0
      %v558 = vadd.f32 %v478, %v557
      %v559 = vpop.f32.mrf.mxu0
      %560 = vdwg.mxu0
      %v561 = vxor.u32 %v555, 2147483648
      %v562 = vxor.u32 %v558, 2147483648
      %v563 = vmul.f32 %v561, 1.442695
      %v564 = vpow.pop %v563
      %v565 = vmul.f32 %v562, 1.442695
      %v566 = vpow.pop %v565
      %v567 = vadd.f32 %v564, 1.0
      %v568 = vadd.f32 %v566, 1.0
      %v569 = vrcp.pop %v567
      %v570 = vmul.f32 1.0, %v569
      %v571 = vrcp.pop %v568
      %v572 = vmul.f32 1.0, %v571
      %v573 = vunpack.c.l.bf16 %v226
      %v574 = vunpack.c.l.bf16 %v227
      %577 = vrot.lane.b32.xlu0 %v573, 124
      %v578 = vpop.permute.xlu0 %577
      %579 = vrot.lane.b32.xlu0 %v574, 124
      %v580 = vpop.permute.xlu0 %579
      %v583 = vmul.f32 %v570, %v578
      %v584 = vmul.f32 %v572, %v580
      %v585 = vpack.c.bf16 %v584, %v583
      %586 = vmatprep.subr.bf16.mxu0 0
      %587 = vmatpush1.bf16.msra.mxu0 0
      %588 = vmatprep.subr.bf16.mxu0 0
      %589 = vmatpush1.bf16.msra.mxu0 0
      %590 = vmatprep.subr.bf16.mxu0 0
      %591 = vmatpush1.bf16.msra.mxu0 0
      %592 = vmatprep.subr.bf16.mxu0 0
      %593 = vmatpush1.bf16.msra.mxu0 0
      %594 = vmatprep.subr.bf16.mxu0 0
      %595 = vmatpush1.bf16.msra.mxu0 0
      %596 = vmatprep.subr.bf16.mxu0 0
      %597 = vmatpush1.bf16.msra.mxu0 0
      %598 = vmatprep.subr.bf16.mxu0 0
      %599 = vmatpush1.bf16.msra.mxu0 0
      %600 = vmatprep.subr.bf16.mxu0 0
      %601 = vmatpush1.bf16.msra.mxu0 %v585
      %602 = vmatprep.subr.bf16.mxu0 0
      %603 = vmatpush2.bf16.msra.mxu0 0
      %604 = vmatprep.subr.bf16.mxu0 0
      %605 = vmatpush2.bf16.msra.mxu0 0
      %606 = vmatprep.subr.bf16.mxu0 0
      %607 = vmatpush2.bf16.msra.mxu0 0
      %608 = vmatprep.subr.bf16.mxu0 0
      %609 = vmatpush2.bf16.msra.mxu0 0
      %610 = vmatprep.subr.bf16.mxu0 0
      %611 = vmatpush2.bf16.msra.mxu0 0
      %612 = vmatprep.subr.bf16.mxu0 0
      %613 = vmatpush2.bf16.msra.mxu0 0
      %614 = vmatprep.subr.bf16.mxu0 0
      %615 = vmatpush2.bf16.msra.mxu0 0
      %616 = vmatprep.subr.bf16.mxu0 0
      %617 = vmatpush2.bf16.msra.mxu0 0
      %618 = vmatprep.mubr.bf16.mxu0 0
      %619 = vmatmul.mubr.bf16.gmra.mxu0 %v278
      %v620 = vpop.f32.mrf.mxu0
      %v621 = vadd.f32 0.0, %v620
      %v622 = vpop.f32.mrf.mxu0
      %v623 = vpop.f32.mrf.mxu0
      %v624 = vadd.f32 0.0, %v623
      %v625 = vpop.f32.mrf.mxu0
      %626 = vmatprep.mubr.bf16.mxu0 0
      %627 = vmatmul.mubr.bf16.gmra.mxu0 %v281
      %v628 = vpop.f32.mrf.mxu0
      %v629 = vadd.f32 0.0, %v628
      %v630 = vpop.f32.mrf.mxu0
      %v631 = vpop.f32.mrf.mxu0
      %v632 = vadd.f32 0.0, %v631
      %v633 = vpop.f32.mrf.mxu0
      %634 = vmatprep.mubr.bf16.mxu0 0
      %635 = vmatmul.mubr.bf16.gmra.mxu0 %v284
      %v636 = vpop.f32.mrf.mxu0
      %v637 = vadd.f32 0.0, %v636
      %v638 = vpop.f32.mrf.mxu0
      %v639 = vpop.f32.mrf.mxu0
      %v640 = vadd.f32 0.0, %v639
      %v641 = vpop.f32.mrf.mxu0
      %642 = vmatprep.mubr.bf16.mxu0 0
      %643 = vmatmul.mubr.bf16.gmra.mxu0 %v287
      %v644 = vpop.f32.mrf.mxu0
      %v645 = vadd.f32 0.0, %v644
      %v646 = vpop.f32.mrf.mxu0
      %v647 = vpop.f32.mrf.mxu0
      %v648 = vadd.f32 0.0, %v647
      %v649 = vpop.f32.mrf.mxu0
      %650 = vmatprep.mubr.bf16.mxu0 0
      %651 = vmatmul.mubr.bf16.gmra.mxu0 %v290
      %v652 = vpop.f32.mrf.mxu0
      %v653 = vadd.f32 0.0, %v652
      %v654 = vpop.f32.mrf.mxu0
      %v655 = vpop.f32.mrf.mxu0
      %v656 = vadd.f32 0.0, %v655
      %v657 = vpop.f32.mrf.mxu0
      %658 = vmatprep.mubr.bf16.mxu0 0
      %659 = vmatmul.mubr.bf16.gmra.mxu0 %v293
      %v660 = vpop.f32.mrf.mxu0
      %v661 = vadd.f32 0.0, %v660
      %v662 = vpop.f32.mrf.mxu0
      %v663 = vpop.f32.mrf.mxu0
      %v664 = vadd.f32 0.0, %v663
      %v665 = vpop.f32.mrf.mxu0
      %666 = vdwg.mxu0
      %v667 = vpack.c.bf16 %v624, %v621
      %v669 = vunpack.c.l.b16 %v667
      %v670 = vunpack.c.h.b16 %v667
      %v671 = vpack.c.b16 %v669, %v669
      %v672 = vpack.c.b16 %v670, %v670
      %vm675 = vcmask 60416
      %676 = vst.msk [vmem:[#allocation3] sm:$0xf] %vm675, %v671
      %677 = vst.msk [vmem:[#allocation3 + $0x4] sm:$0xf] %vm675, %v672
      %v678 = vpack.c.bf16 %v632, %v629
      %v680 = vunpack.c.l.b16 %v678
      %v681 = vunpack.c.h.b16 %v678
      %v682 = vpack.c.b16 %v680, %v680
      %v683 = vpack.c.b16 %v681, %v681
      %684 = vrot.lane.b32.xlu0 %v682, 8
      %v685 = vpop.permute.xlu0 %684
      %686 = vrot.lane.b32.xlu0 %v683, 8
      %v687 = vpop.permute.xlu0 %686
      %vm690 = vcmask 126016
      %691 = vst.msk [vmem:[#allocation3] sm:$0xf] %vm690, %v685
      %692 = vst.msk [vmem:[#allocation3 + $0x4] sm:$0xf] %vm690, %v687
      %v693 = vpack.c.bf16 %v640, %v637
      %v695 = vunpack.c.l.b16 %v693
      %v696 = vunpack.c.h.b16 %v693
      %v697 = vpack.c.b16 %v695, %v695
      %v698 = vpack.c.b16 %v696, %v696
      %699 = vrot.lane.b32.xlu0 %v697, 16
      %v700 = vpop.permute.xlu0 %699
      %701 = vrot.lane.b32.xlu0 %v698, 16
      %v702 = vpop.permute.xlu0 %701
      %vm705 = vcmask 191616
      %706 = vst.msk [vmem:[#allocation3] sm:$0xf] %vm705, %v700
      %707 = vst.msk [vmem:[#allocation3 + $0x4] sm:$0xf] %vm705, %v702
      %v708 = vpack.c.bf16 %v648, %v645
      %v710 = vunpack.c.l.b16 %v708
      %v711 = vunpack.c.h.b16 %v708
      %v712 = vpack.c.b16 %v710, %v710
      %v713 = vpack.c.b16 %v711, %v711
      %714 = vrot.lane.b32.xlu0 %v712, 24
      %v715 = vpop.permute.xlu0 %714
      %716 = vrot.lane.b32.xlu0 %v713, 24
      %v717 = vpop.permute.xlu0 %716
      %vm720 = vcmask 257216
      %721 = vst.msk [vmem:[#allocation3] sm:$0xf] %vm720, %v715
      %722 = vst.msk [vmem:[#allocation3 + $0x4] sm:$0xf] %vm720, %v717
      %v723 = vpack.c.bf16 %v656, %v653
      %v725 = vunpack.c.l.b16 %v723
      %v726 = vunpack.c.h.b16 %v723
      %v727 = vpack.c.b16 %v725, %v725
      %v728 = vpack.c.b16 %v726, %v726
      %729 = vrot.lane.b32.xlu0 %v727, 32
      %v730 = vpop.permute.xlu0 %729
      %731 = vrot.lane.b32.xlu0 %v728, 32
      %v732 = vpop.permute.xlu0 %731
      %vm735 = vcmask 322816
      %736 = vst.msk [vmem:[#allocation3] sm:$0xf] %vm735, %v730
      %737 = vst.msk [vmem:[#allocation3 + $0x4] sm:$0xf] %vm735, %v732
      %v738 = vpack.c.bf16 %v664, %v661
      %v740 = vunpack.c.l.b16 %v738
      %v741 = vunpack.c.h.b16 %v738
      %v742 = vpack.c.b16 %v740, %v740
      %v743 = vpack.c.b16 %v741, %v741
      %744 = vrot.lane.b32.xlu0 %v742, 40
      %v745 = vpop.permute.xlu0 %744
      %746 = vrot.lane.b32.xlu0 %v743, 40
      %v747 = vpop.permute.xlu0 %746
      %vm750 = vcmask 388416
      %751 = vst.msk [vmem:[#allocation3] sm:$0xf] %vm750, %v745
      %752 = vst.msk [vmem:[#allocation3 + $0x4] sm:$0xf] %vm750, %v747
      %v753 = vld [vmem:[#allocation3] sm:$0xf]
      %v754 = vld [vmem:[#allocation3 + $0x4] sm:$0xf]
      %v755 = vld [vmem:[%s3] sm:$0xf]
      %v756 = vld [vmem:[%s3 + $0x4] sm:$0xf]
      %v757 = vld [vmem:[%s3 + $0x8] sm:$0xf]
      %v758 = vld [vmem:[%s3 + $0xc] sm:$0xf]
      %v759 = vld [vmem:[%s3 + $0x10] sm:$0xf]
      %v760 = vld [vmem:[%s3 + $0x14] sm:$0xf]
      %v763 = vunpack.c.l.b16 %v753
      %v764 = vunpack.c.l.b16 %v754
      %v765 = vpack.c.b16 %v764, %v763
      %v772 = vunpack.c.l.b16 %v755
      %v773 = vunpack.c.l.b16 %v756
      %v774 = vunpack.c.l.b16 %v757
      %v775 = vunpack.c.l.b16 %v758
      %v776 = vunpack.c.l.b16 %v759
      %v777 = vunpack.c.l.b16 %v760
      %v778 = vpack.c.b16 %v773, %v772
      %v779 = vpack.c.b16 %v775, %v774
      %v780 = vpack.c.b16 %v777, %v776
      %vm784 = vcmask 392192
      %v786 = vsel %vm784, %v765, 0
      %788 = vmatprep.subr.bf16.mxu0 0
      %789 = vmatpush1.bf16.msra.mxu0 0
      %790 = vmatprep.subr.bf16.mxu0 0
      %791 = vmatpush1.bf16.msra.mxu0 0
      %792 = vmatprep.subr.bf16.mxu0 0
      %793 = vmatpush1.bf16.msra.mxu0 0
      %794 = vmatprep.subr.bf16.mxu0 0
      %795 = vmatpush1.bf16.msra.mxu0 0
      %796 = vmatprep.subr.bf16.mxu0 0
      %797 = vmatpush1.bf16.msra.mxu0 0
      %798 = vmatprep.subr.bf16.mxu0 0
      %799 = vmatpush1.bf16.msra.mxu0 %v780
      %800 = vmatprep.subr.bf16.mxu0 0
      %801 = vmatpush1.bf16.msra.mxu0 %v779
      %802 = vmatprep.subr.bf16.mxu0 0
      %803 = vmatpush1.bf16.msra.mxu0 %v778
      %804 = vmatprep.subr.bf16.mxu0 0
      %805 = vmatpush2.bf16.msra.mxu0 0
      %806 = vmatprep.subr.bf16.mxu0 0
      %807 = vmatpush2.bf16.msra.mxu0 0
      %808 = vmatprep.subr.bf16.mxu0 0
      %809 = vmatpush2.bf16.msra.mxu0 0
      %810 = vmatprep.subr.bf16.mxu0 0
      %811 = vmatpush2.bf16.msra.mxu0 0
      %812 = vmatprep.subr.bf16.mxu0 0
      %813 = vmatpush2.bf16.msra.mxu0 0
      %814 = vmatprep.subr.bf16.mxu0 0
      %815 = vmatpush2.bf16.msra.mxu0 0
      %816 = vmatprep.subr.bf16.mxu0 0
      %817 = vmatpush2.bf16.msra.mxu0 0
      %818 = vmatprep.subr.bf16.mxu0 0
      %819 = vmatpush2.bf16.msra.mxu0 0
      %820 = vmatprep.mubr.bf16.mxu0 0
      %821 = vmatmul.mubr.bf16.gmra.mxu0 %v786
      %v822 = vpop.f32.mrf.mxu0
      %v823 = vadd.f32 0.0, %v822
      %v824 = vpop.f32.mrf.mxu0
      %v825 = vpop.f32.mrf.mxu0
      %v826 = vadd.f32 0.0, %v825
      %v827 = vpop.f32.mrf.mxu0
      %828 = vdwg.mxu0
      %831 = vrot.lane.b32.xlu0 %v823, 16
      %v832 = vpop.permute.xlu0 %831
      %833 = vrot.lane.b32.xlu0 %v826, 16
      %v834 = vpop.permute.xlu0 %833
      %v837 = vadd.f32 %v555, %v832
      %v838 = vadd.f32 %v558, %v834
      %v839 = vtanh.pop %v837
      %v840 = vtanh.pop %v838
      %841 = vrot.lane.b32.xlu0 %v573, 4
      %v842 = vpop.permute.xlu0 %841
      %843 = vrot.lane.b32.xlu0 %v574, 4
      %v844 = vpop.permute.xlu0 %843
      %v847 = vmul.f32 %v570, %v842
      %v848 = vmul.f32 %v572, %v844
      %v849 = vsub.f32 1.0, %v570
      %v850 = vsub.f32 1.0, %v572
      %853 = vrot.lane.b32.xlu0 %v839, 120
      %v854 = vpop.permute.xlu0 %853
      %855 = vrot.lane.b32.xlu0 %v840, 120
      %v856 = vpop.permute.xlu0 %855
      %v859 = vmul.f32 %v849, %v854
      %v860 = vmul.f32 %v850, %v856
      %v861 = vadd.f32 %v847, %v859
      %v862 = vadd.f32 %v848, %v860
      %865 = vrot.lane.b32.xlu0 %v861, 120
      %v866 = vpop.permute.xlu0 %865
      %867 = vrot.lane.b32.xlu0 %v862, 120
      %v868 = vpop.permute.xlu0 %867
      %vm871 = vcmask 64512
      %872 = vst.msk [vmem:[%s224] sm:$0xff] %vm871, %v866
      %873 = vst.msk [vmem:[%s224 + $0x8] sm:$0xff] %vm871, %v868
      %p874 = scmp.lt.s32.totalorder %s16, 1
      %s875 = scalar_select %p874, %s16, 1
      %s876 = smul.addr %s875, 2
      %s877 = smul.addr %s876, 8
      %s878 = scalar_lea.vmem %s5, %s877
      // Predicated region
      $region41: #{agcrn_cell.1} parent=39 // pred_check
        %p879 = pneg %p144
      $region42: #{agcrn_cell.1} parent=39 // pred_check_branch
        %881 = sbr.rel (%p879) target = $region44
      $region43: #{agcrn_cell.1} parent=39 // pred_region
        _
      $region44: #{agcrn_cell.1} parent=39 // pred_fallthru
        _
    $region40: #{agcrn_cell.1} parent=5 // pred_fallthru
      _
    %p882 = scmp.le.s32.totalorder 2, %s11
    // Predicated region
    $region45: #{agcrn_cell.1} parent=5 // pred_check
      %p883 = pneg %p882
    $region46: #{agcrn_cell.1} parent=5 // pred_check_branch
      %885 = sbr.rel (%p883) target = $region48
    $region47: #{agcrn_cell.1} parent=5 // pred_region
      %s886 = ssub.s32 %s11, 2
      // Predicated region
      $region49: #{agcrn_cell.1} parent=47 // pred_check
        %p887 = pneg %p150
      $region50: #{agcrn_cell.1} parent=47 // pred_check_branch
        %889 = sbr.rel (%p887) target = $region52
      $region51: #{agcrn_cell.1} parent=47 // pred_region
        %p890 = scmp.lt.s32.totalorder %s17, 1
        %s891 = scalar_select %p890, %s17, 1
        %s892 = smul.addr %s891, 2
        %s893 = smul.addr %s892, 8
        %s894 = scalar_lea.vmem %s5, %s893
      $region52: #{agcrn_cell.1} parent=47 // pred_fallthru
        _
    $region48: #{agcrn_cell.1} parent=5 // pred_fallthru
      _
  $region6: #{agcrn_cell.1} parent=0 // loop_footer
    %s15 = sadd.s32 1, %s11
  $region7: #{agcrn_cell.1} parent=0 // loop_footer_branch
    %10 = sbr.rel target = $region3
  $region8: #{agcrn_cell.1} parent=0 // loop_exit
    _

</llo_original>
